<compile_context>
chip_gen: v7x
topology: tpu7x:2x2x1
jax: 0.10.0
libtpu: 0.0.40
codegen_flags: <defaults>
</compile_context>

<pallas_src>
import functools

import jax
import jax.numpy as jnp
from jax import lax
from jax.experimental import pallas as pl
from jax.experimental.pallas import tpu as pltpu

_LANES = 128
_C_CHUNK_MAX = 32       # channels reduced per in-kernel chunk


def _vmem_capacity_bytes():
    try:
        info = pltpu.get_tpu_info()
        cap = int(getattr(info, "vmem_capacity_bytes", 0) or 0)
        if cap > 0:
            return cap
    except Exception:
        pass
    return 64 * 1024 * 1024          # conservative fallback (v7x-sized)


def _ipow(x, n):
    """x**n for a small non-negative python int n, as pure VPU multiplies."""
    assert n >= 0
    result = None
    base = x
    while n:
        if n & 1:
            result = base if result is None else result * base
        n >>= 1
        if n:
            base = base * base
    return jnp.ones_like(x) if result is None else result


# --------------------------------------------------------------------------
# Pallas kernel: accumulate the per-pixel moment planes needed by the loss
# --------------------------------------------------------------------------
def _cdo_moments_kernel(*refs, gamma, has_mask, c_total, c_chunk, valid_pixels):
    """Output block (1, NMOM, TR, 128), resident across the pixel-block axis.

    mask=None : planes [d_p, d_p**g, d_p**(g+1)]                             (3)
    masked    : planes [d_p*wn, d_p**g*wn, d_p**(g+1)*wn, wn,
                        d_p*ws, d_p**(1-g)*ws, d_p**(-g)*ws, ws]             (8)
    d_p = || normalize(fe) - normalize(fa) ||^2 per pixel (channel axis),
    wn / ws select normal (mask==0) / anomalous (mask!=0) pixels; pixels added
    by lane padding are excluded from both subsets.
    """
    if has_mask:
        fe_ref, fa_ref, m_ref, out_ref = refs
    else:
        fe_ref, fa_ref, out_ref = refs

    @pl.when(pl.program_id(2) == 0)
    def _zero():
        out_ref[...] = jnp.zeros_like(out_ref)

    tr, lanes = fe_ref.shape[2], fe_ref.shape[3]
    f32 = jnp.float32
    zero_plane = jnp.zeros((tr, lanes), f32)

    # ---- fused, chunked channel reduction: se = sum_c fe^2, sa = sum_c fa^2,
    # ---- sc = sum_c fe*fa; each element loaded from VMEM once, f32 temporaries
    # ---- bounded to one channel chunk.
    def add_chunk(fe_c, fa_c, carry):
        se, sa, sc = carry
        fe_c = fe_c.astype(f32)
        fa_c = fa_c.astype(f32)
        return (se + jnp.sum(fe_c * fe_c, axis=0),
                sa + jnp.sum(fa_c * fa_c, axis=0),
                sc + jnp.sum(fe_c * fa_c, axis=0))

    carry = (zero_plane, zero_plane, zero_plane)
    n_full, rem = divmod(c_total, c_chunk)
    if n_full == 1 and rem == 0:
        carry = add_chunk(fe_ref[0], fa_ref[0], carry)
    else:
        if n_full > 0:
            def body(ci, c):
                off = pl.multiple_of(ci * c_chunk, c_chunk)
                return add_chunk(fe_ref[0, pl.ds(off, c_chunk)],
                                 fa_ref[0, pl.ds(off, c_chunk)], c)
            carry = lax.fori_loop(0, n_full, body, carry,
                                  unroll=bool(n_full <= 8))
        if rem:
            carry = add_chunk(fe_ref[0, n_full * c_chunk:c_total],
                              fa_ref[0, n_full * c_chunk:c_total], carry)
    se, sa, sc = carry

    # ---- per-pixel squared distance of the L2-normalized vectors (cosine form)
    eps2 = jnp.float32(1e-24)                       # (F.normalize eps)^2
    inv_ne = lax.rsqrt(jnp.maximum(se, eps2))       # EUP slot
    inv_na = lax.rsqrt(jnp.maximum(sa, eps2))
    d_p = (se * (inv_ne * inv_ne) + sa * (inv_na * inv_na)
           - 2.0 * sc * (inv_ne * inv_na))
    d_p = jnp.maximum(d_p, 0.0)                     # clamp fp noise (exact >= 0)

    int_gamma = float(gamma) == float(int(gamma)) and int(gamma) >= 1
    if int_gamma:
        d_g = _ipow(d_p, int(gamma))                # VPU multiplies, no exp/log
    else:
        d_g = d_p ** jnp.float32(gamma)
    d_g1 = d_g * d_p                                # d_p**(gamma+1)

    if not has_mask:
        # All pixels are "normal"; lane-padded pixels have fe = fa = 0 -> d_p = 0
        # and contribute nothing; the pixel count is added statically outside.
        out_ref[0, 0] += d_p
        out_ref[0, 1] += d_g
        out_ref[0, 2] += d_g1
    else:
        m = m_ref[0, 0]                             # (TR, 128)
        sel_n = (m == 0)
        sel_s = jnp.logical_not(sel_n)
        if valid_pixels is not None:                # exclude lane-padded pixels
            blk = pl.program_id(1) * pl.num_programs(2) + pl.program_id(2)
            row = lax.broadcasted_iota(jnp.int32, (tr, lanes), 0) + blk * tr
            col = lax.broadcasted_iota(jnp.int32, (tr, lanes), 1)
            valid = (row * lanes + col) < valid_pixels
            sel_n = jnp.logical_and(sel_n, valid)
            sel_s = jnp.logical_and(sel_s, valid)
        wn = jnp.where(sel_n, 1.0, 0.0).astype(f32)
        ws = jnp.where(sel_s, 1.0, 0.0).astype(f32)

        out_ref[0, 0] += d_p * wn
        out_ref[0, 1] += d_g * wn
        out_ref[0, 2] += d_g1 * wn
        out_ref[0, 3] += wn

        # Negative powers (anomalous subset only); clamp avoids inf for d_p == 0.
        tiny = jnp.float32(1e-12)
        d_pos = jnp.where(sel_s, jnp.maximum(d_p, tiny), 1.0)
        if int_gamma:
            inv_g = 1.0 / _ipow(d_pos, int(gamma))
        else:
            inv_g = d_pos ** jnp.float32(-gamma)
        out_ref[0, 4] += d_p * ws
        out_ref[0, 5] += (inv_g * d_pos) * ws       # d_p**(1-gamma)
        out_ref[0, 6] += inv_g * ws                 # d_p**(-gamma)
        out_ref[0, 7] += ws


# --------------------------------------------------------------------------
# Tiling / VMEM sizing (per generation, via get_tpu_info)
# --------------------------------------------------------------------------
def _choose_tiling(batch, c, r, itemsize, nmom, has_mask):
    sub = 16 if itemsize <= 2 else 8
    c_chunk = min(c, _C_CHUNK_MAX)
    vmem_cap = _vmem_capacity_bytes()
    budget = int(vmem_cap * 0.70)
    per_tr = (2 * 2 * c * _LANES * itemsize             # fe + fa, double-buffered
              + 2 * nmom * _LANES * 4                   # resident accumulator
              + (2 * 2 * _LANES * 4 if has_mask else 0)  # f32 mask stream
              + (4 * c_chunk + 16) * _LANES * 4)        # in-kernel f32 temporaries
    tr_max = max(sub, budget // per_tr)
    # Keep both v7x TensorCores busy for single-image batches via a second
    # "parallel" axis over independent spatial halves.
    split = 2 if (batch == 1 and r >= 2 * sub) else 1
    if split == 1 and r <= tr_max:
        tr, n_k, r_pad = r, 1, r                        # whole image per grid step
    else:
        tr = max(sub, (min(tr_max, pl.cdiv(r, split)) // sub) * sub)
        step = split * tr
        r_pad = pl.cdiv(r, step) * step
        n_k = r_pad // step
    return tr, split, n_k, r_pad, c_chunk, vmem_cap


def _vmem_limit_bytes(c, tr, nmom, itemsize, has_mask, c_chunk, vmem_cap):
    tile_in = c * tr * _LANES * itemsize
    tile_out = nmom * tr * _LANES * 4
    tile_mask = tr * _LANES * 4 if has_mask else 0
    temps = (4 * c_chunk + 16) * tr * _LANES * 4
    need = 2 * 2 * tile_in + 2 * tile_out + 2 * tile_mask + temps + (2 << 20)
    return int(min(max(need, 32 << 20), int(vmem_cap * 0.8)))


def cdo_scale_moments(fe, fa, mask, gamma):
    """fe, fa: (B, C, H, W); mask: (B, 1, H, W) 0/1 float or None.
    Returns the (3,) (mask=None) or (8,) (masked) global reduction moments."""
    B, C, H, W = fe.shape
    has_mask = mask is not None
    nmom = 8 if has_mask else 3
    itemsize = jnp.dtype(fe.dtype).itemsize

    P = H * W
    R = pl.cdiv(P, _LANES)
    tr, split, n_k, r_pad, c_chunk, vmem_cap = _choose_tiling(
        B, C, R, itemsize, nmom, has_mask)
    p_pad = r_pad * _LANES

    def to_lane_dense(x, c):                       # (B,c,H,W) -> (B,c,r_pad,128)
        x = x.reshape(B, c, P)
        if p_pad != P:
            x = jnp.pad(x, ((0, 0), (0, 0), (0, p_pad - P)))
        return x.reshape(B, c, r_pad, _LANES)

    args = [to_lane_dense(fe, C), to_lane_dense(fa, C)]
    feat_spec = pl.BlockSpec((1, C, tr, _LANES),
                             lambda b, s, k: (b, 0, s * n_k + k, 0))
    in_specs = [feat_spec, feat_spec]
    if has_mask:
        args.append(to_lane_dense(mask, 1))
        in_specs.append(pl.BlockSpec((1, 1, tr, _LANES),
                                     lambda b, s, k: (b, 0, s * n_k + k, 0)))

    valid_pixels = P if (has_mask and p_pad != P) else None
    kernel = functools.partial(
        _cdo_moments_kernel, gamma=gamma, has_mask=has_mask,
        c_total=C, c_chunk=c_chunk, valid_pixels=valid_pixels)

    partials = pl.pallas_call(
        kernel,
        out_shape=jax.ShapeDtypeStruct((B * split, nmom, tr, _LANES), jnp.float32),
        grid=(B, split, n_k),
        in_specs=in_specs,
        # Per-(batch, split) resident accumulator block -> race-free under the
        # two "parallel" axes; the reduction (pixel-block) axis is last.
        out_specs=pl.BlockSpec((1, nmom, tr, _LANES),
                               lambda b, s, k: (b * split + s, 0, 0, 0)),
        compiler_params=pltpu.CompilerParams(
            dimension_semantics=("parallel", "parallel", "arbitrary"),
            vmem_limit_bytes=_vmem_limit_bytes(C, tr, nmom, itemsize, has_mask,
                                               c_chunk, vmem_cap),
        ),
    )(*args)
    # Tiny (B*S, NMOM, TR, 128) tensor of partials -> final scalars in plain XLA.
    return jnp.sum(partials, axis=(0, 2, 3))


# --------------------------------------------------------------------------
# Plain-JAX glue: interpolation (matches F.interpolate semantics)
# --------------------------------------------------------------------------
def _interp_matrix(out_size, in_size, dtype=jnp.float32):
    """Rows of the 1-D bilinear align_corners=True interpolation operator."""
    if out_size == 1:
        src = jnp.zeros((1,), dtype)
    else:
        src = jnp.arange(out_size, dtype=dtype) * ((in_size - 1) / (out_size - 1))
    i0 = jnp.clip(jnp.floor(src).astype(jnp.int32), 0, in_size - 1)
    i1 = jnp.minimum(i0 + 1, in_size - 1)
    w1 = src - i0.astype(dtype)
    w0 = 1.0 - w1
    return (jax.nn.one_hot(i0, in_size, dtype=dtype) * w0[:, None]
            + jax.nn.one_hot(i1, in_size, dtype=dtype) * w1[:, None])


def bilinear_resize_align_corners(x, out_h, out_w):
    """F.interpolate(x, (out_h,out_w), mode='bilinear', align_corners=True),
    expressed as two small matmuls (separable) so the otherwise-idle MXU does it."""
    b, c, h, w = x.shape
    if (h, w) == (out_h, out_w):
        return x
    f32 = jnp.float32
    xf = x.astype(f32)
    if h != out_h:
        xf = jnp.einsum('iy,bcyx->bcix', _interp_matrix(out_h, h, f32), xf)
    if w != out_w:
        xf = jnp.einsum('jx,bcix->bcij', _interp_matrix(out_w, w, f32), xf)
    return xf.astype(x.dtype)


def nearest_resize(x, out_h, out_w):
    """F.interpolate(x, (out_h, out_w), mode='nearest')."""
    b, c, h, w = x.shape
    if (h, w) == (out_h, out_w):
        return x
    ys = jnp.floor(jnp.arange(out_h) * (h / out_h)).astype(jnp.int32)
    xs = jnp.floor(jnp.arange(out_w) * (w / out_w)).astype(jnp.int32)
    return x[:, :, ys[:, None], xs[None, :]]


# --------------------------------------------------------------------------
# CDOLoss forward
# --------------------------------------------------------------------------
class CDOLossPallas:
    """Forward-pass equivalent of the PyTorch CDOLoss module."""

    def __init__(self, gamma=2, OOM=True, stream_bf16=True):
        self.gamma = gamma
        self.OOM = OOM
        # Stream the resize-materialized pyramid levels as bf16 (halves their
        # HBM traffic on this bandwidth-bound kernel; accumulation stays f32).
        # Set False for strict f32 numerics.
        self.stream_bf16 = stream_bf16

    def __call__(self, fe_list, fa_list, mask=None):
        B0, _, H0, W0 = fe_list[0].shape

        def prep(f):
            resized = f.shape[2] != H0 or f.shape[3] != W0
            f = bilinear_resize_align_corners(f, H0, W0)
            # Only resized levels are cast (the cast fuses into the resize output
            # write); the native-resolution level keeps its dtype — casting it
            # would add an extra HBM pass.
            if self.stream_bf16 and resized and f.dtype == jnp.float32:
                f = f.astype(jnp.bfloat16)
            return f

        fe_list = [prep(f) for f in fe_list]
        fa_list = [prep(f) for f in fa_list]

        m_all = None
        if mask is not None:
            m_all = (nearest_resize(mask, H0, W0) != 0).astype(jnp.float32)

        loss = jnp.float32(0.0)
        for fe, fa in zip(fe_list, fa_list):
            Bl, C, H, W = fe.shape
            moments = cdo_scale_moments(fe, fa, m_all, self.gamma)

            if mask is None:
                # All pixels are normal; the anomalous subset is empty, so
                # loss_s = weight_s = 0 (torch.sum over empty tensors).
                s1, sg, sg1 = moments[0], moments[1], moments[2]
                cn = jnp.float32(Bl * H * W)
                if self.OOM:
                    mu = s1 / cn
                    mu = jnp.where(mu > 0, mu, jnp.float32(1.0))      # guard mu==0
                    denom = mu ** self.gamma
                    loss_n, w_n = sg1 / denom, sg / denom
                else:
                    loss_n, w_n = s1, cn
                loss = loss + loss_n / w_n * Bl
            else:
                s1n, sgn, sg1n, cn, s1s, s1mg, smg, cs = (moments[k] for k in range(8))
                if self.OOM:
                    mu_n = s1n / jnp.maximum(cn, 1.0)
                    mu_n = jnp.where(mu_n > 0, mu_n, jnp.float32(1.0))
                    denom_n = mu_n ** self.gamma
                    loss_n = jnp.where(cn > 0, sg1n / denom_n, 0.0)
                    w_n = jnp.where(cn > 0, sgn / denom_n, 0.0)
                    mu_s = s1s / jnp.maximum(cs, 1.0)
                    mu_s_g = mu_s ** self.gamma
                    loss_s = jnp.where(cs > 0, mu_s_g * s1mg, 0.0)
                    w_s = jnp.where(cs > 0, mu_s_g * smg, 0.0)
                else:
                    loss_n, w_n = s1n, cn
                    loss_s, w_s = s1s, cs
                loss = loss + (loss_n - loss_s) / (w_n + w_s) * Bl
        return loss


# --------------------------------------------------------------------------
# Pure-JAX reference (explicit normalization, per-pixel OOM weights)
# --------------------------------------------------------------------------
def reference_loss(fe_list, fa_list, mask=None, gamma=2, OOM=True):
    b0, _, h0, w0 = fe_list[0].shape
    fe_list = [bilinear_resize_align_corners(f, h0, w0).astype(jnp.float32)
               for f in fe_list]
    fa_list = [bilinear_resize_align_corners(f, h0, w0).astype(jnp.float32)
               for f in fa_list]
    loss = jnp.float32(0.0)
    for fe, fa in zip(fe_list, fa_list):
        B, C, H, W = fe.shape
        if mask is not None:
            m = nearest_resize(mask, H, W)
        else:
            m = jnp.zeros((B, 1, H, W), jnp.float32)
        mvec = jnp.transpose(m, (0, 2, 3, 1)).reshape(-1)
        fe2 = jnp.transpose(fe, (0, 2, 3, 1)).reshape(-1, C)
        fa2 = jnp.transpose(fa, (0, 2, 3, 1)).reshape(-1, C)
        fe2 = fe2 / jnp.maximum(jnp.linalg.norm(fe2, axis=1, keepdims=True), 1e-12)
        fa2 = fa2 / jnp.maximum(jnp.linalg.norm(fa2, axis=1, keepdims=True), 1e-12)
        d_p = jnp.sum((fe2 - fa2) ** 2, axis=1)
        wn = (mvec == 0)
        ws = jnp.logical_not(wn)
        cn = jnp.sum(wn.astype(jnp.float32))
        cs = jnp.sum(ws.astype(jnp.float32))
        if OOM:
            mu_n = jnp.sum(jnp.where(wn, d_p, 0.0)) / jnp.maximum(cn, 1.0)
            mu_n = jnp.where(mu_n > 0, mu_n, 1.0)
            w_pix_n = (d_p / mu_n) ** gamma
            loss_n = jnp.where(cn > 0, jnp.sum(jnp.where(wn, d_p * w_pix_n, 0.0)), 0.0)
            weight_n = jnp.where(cn > 0, jnp.sum(jnp.where(wn, w_pix_n, 0.0)), 0.0)
            mu_s = jnp.sum(jnp.where(ws, d_p, 0.0)) / jnp.maximum(cs, 1.0)
            d_safe = jnp.where(ws, d_p, 1.0)
            w_pix_s = (mu_s / d_safe) ** gamma
            loss_s = jnp.where(cs > 0, jnp.sum(jnp.where(ws, d_p * w_pix_s, 0.0)), 0.0)
            weight_s = jnp.where(cs > 0, jnp.sum(jnp.where(ws, w_pix_s, 0.0)), 0.0)
        else:
            loss_n, weight_n = jnp.sum(jnp.where(wn, d_p, 0.0)), cn
            loss_s, weight_s = jnp.sum(jnp.where(ws, d_p, 0.0)), cs
        loss = loss + (loss_n - loss_s) / (weight_n + weight_s) * B
    return loss


if __name__ == "__main__":
    key = jax.random.PRNGKey(0)
    keys = jax.random.split(key, 12)

    # multi-scale pyramid of (expert, apprentice) feature maps, NCHW
    shapes = [(2, 4, 16, 16), (2, 8, 8, 8), (2, 16, 4, 4)]
    fe_list = [jax.random.normal(keys[i], s, jnp.float32) for i, s in enumerate(shapes)]
    fa_list = [jax.random.normal(keys[3 + i], s, jnp.float32) for i, s in enumerate(shapes)]
    mask = (jax.random.uniform(keys[6], (2, 1, 16, 16)) > 0.7).astype(jnp.float32)

    # ---- strict f32 streaming: tight check against the pure-JAX reference
    loss_f32 = CDOLossPallas(gamma=2, OOM=True, stream_bf16=False)
    out = jax.block_until_ready(loss_f32(fe_list, fa_list, mask=None))
    ref = jax.block_until_ready(reference_loss(fe_list, fa_list, mask=None, gamma=2))
    assert jnp.isfinite(out), "kernel produced non-finite loss"
    assert jnp.allclose(out, ref, rtol=1e-4, atol=1e-5), (out, ref)

    out_m = jax.block_until_ready(loss_f32(fe_list, fa_list, mask=mask))
    ref_m = jax.block_until_ready(reference_loss(fe_list, fa_list, mask=mask, gamma=2))
    assert jnp.isfinite(out_m), "kernel produced non-finite masked loss"
    assert jnp.allclose(out_m, ref_m, rtol=1e-3, atol=1e-4), (out_m, ref_m)

    # ---- default config (bf16 streaming); B=1 exercises the v7x spatial split
    # ---- and C>32 exercises the chunked channel-reduction loop.
    shapes1 = [(1, 72, 64, 64), (1, 40, 32, 32)]
    fe1 = [jax.random.normal(keys[7 + i], s, jnp.float32) for i, s in enumerate(shapes1)]
    fa1 = [jax.random.normal(keys[9 + i], s, jnp.float32) for i, s in enumerate(shapes1)]
    loss_fast = CDOLossPallas(gamma=2, OOM=True)          # stream_bf16=True default
    out1 = jax.block_until_ready(loss_fast(fe1, fa1, mask=None))
    ref1 = jax.block_until_ready(reference_loss(fe1, fa1, mask=None, gamma=2))
    assert jnp.isfinite(out1), "bf16 kernel produced non-finite loss"
    assert jnp.allclose(out1, ref1, rtol=3e-2, atol=1e-3), (out1, ref1)

    # ---- masked + default bf16 config: compile/run smoke test (values are
    # ---- volatile under bf16 with the anomalous negative-power weighting).
    out2 = jax.block_until_ready(loss_fast(fe_list, fa_list, mask=mask))
    assert jnp.isfinite(out2), "bf16 masked kernel produced non-finite loss"

    print("KERNEL_OK")
</pallas_src>

<mosaic_0001>
module attributes {stable_mosaic.version = 11 : i64} {
  func.func @_cdo_moments_kernel(%arg0: i32, %arg1: i32, %arg2: i32, %arg3: memref<1x4x2x128xf32, #tpu.memory_space<vmem>>, %arg4: memref<1x4x2x128xf32, #tpu.memory_space<vmem>>, %arg5: memref<1x3x2x128xf32, #tpu.memory_space<vmem>>) attributes {dimension_semantics = [#tpu.dimension_semantics<parallel>, #tpu.dimension_semantics<parallel>, #tpu.dimension_semantics<arbitrary>], iteration_bounds = array<i64: 2, 1, 1>, scalar_prefetch = 0 : i64, scratch_operands = 0 : i64, tpu.core_type = #tpu.core_type<tc>, window_params = [{transform_indices = @transform_0, window_bounds = array<i64: 1, 4, 2, 128>}, {transform_indices = @transform_1, window_bounds = array<i64: 1, 4, 2, 128>}, {transform_indices = @transform_2, window_bounds = array<i64: 1, 3, 2, 128>}]} {
    %c0_i32 = arith.constant 0 : i32
    %0 = arith.cmpi eq, %arg2, %c0_i32 : i32
    %1 = arith.extui %0 : i1 to i32
    %c0_i32_0 = arith.constant 0 : i32
    %2 = arith.cmpi ne, %1, %c0_i32_0 : i32
    scf.if %2 {
      %cst_37 = arith.constant 0.000000e+00 : f32
      %55 = vector.broadcast %cst_37 : f32 to vector<1x3x2x128xf32>
      %c0_38 = arith.constant 0 : index
      %c0_39 = arith.constant 0 : index
      %c0_40 = arith.constant 0 : index
      %c0_41 = arith.constant 0 : index
      %56 = vector.load %arg5[%c0_38, %c0_39, %c0_40, %c0_41] : memref<1x3x2x128xf32, #tpu.memory_space<vmem>>, vector<1x3x2x128xf32>
      tpu.vector_store %arg5[%c0_38, %c0_39, %c0_40, %c0_41], %55 {strides = array<i32>} : memref<1x3x2x128xf32, #tpu.memory_space<vmem>>, vector<1x3x2x128xf32>,
    } else {
    }
    %cst = arith.constant 0.000000e+00 : f32
    %3 = vector.broadcast %cst : f32 to vector<2x128xf32>
    %c0 = arith.constant 0 : index
    %c0_1 = arith.constant 0 : index
    %c0_2 = arith.constant 0 : index
    %c0_3 = arith.constant 0 : index
    %4 = vector.load %arg3[%c0, %c0_1, %c0_2, %c0_3] : memref<1x4x2x128xf32, #tpu.memory_space<vmem>>, vector<1x4x2x128xf32>
    %5 = vector.shape_cast %4 : vector<1x4x2x128xf32> to vector<4x2x128xf32>
    %c0_4 = arith.constant 0 : index
    %c0_5 = arith.constant 0 : index
    %c0_6 = arith.constant 0 : index
    %c0_7 = arith.constant 0 : index
    %6 = vector.load %arg4[%c0_4, %c0_5, %c0_6, %c0_7] : memref<1x4x2x128xf32, #tpu.memory_space<vmem>>, vector<1x4x2x128xf32>
    %7 = vector.shape_cast %6 : vector<1x4x2x128xf32> to vector<4x2x128xf32>
    %8 = arith.mulf %5, %5 : vector<4x2x128xf32>
    %cst_8 = arith.constant dense<0.000000e+00> : vector<2x128xf32>
    %9 = vector.multi_reduction <add>, %8, %cst_8 [0] : vector<4x2x128xf32> to vector<2x128xf32>
    %10 = arith.addf %3, %9 : vector<2x128xf32>
    %11 = arith.mulf %7, %7 : vector<4x2x128xf32>
    %cst_9 = arith.constant dense<0.000000e+00> : vector<2x128xf32>
    %12 = vector.multi_reduction <add>, %11, %cst_9 [0] : vector<4x2x128xf32> to vector<2x128xf32>
    %13 = arith.addf %3, %12 : vector<2x128xf32>
    %14 = arith.mulf %5, %7 : vector<4x2x128xf32>
    %cst_10 = arith.constant dense<0.000000e+00> : vector<2x128xf32>
    %15 = vector.multi_reduction <add>, %14, %cst_10 [0] : vector<4x2x128xf32> to vector<2x128xf32>
    %16 = arith.addf %3, %15 : vector<2x128xf32>
    %cst_11 = arith.constant 1.000000e-24 : f32
    %17 = vector.broadcast %cst_11 : f32 to vector<2x128xf32>
    %18 = arith.maximumf %10, %17 : vector<2x128xf32>
    %19 = math.rsqrt %18 : vector<2x128xf32>
    %cst_12 = arith.constant 1.000000e-24 : f32
    %20 = vector.broadcast %cst_12 : f32 to vector<2x128xf32>
    %21 = arith.maximumf %13, %20 : vector<2x128xf32>
    %22 = math.rsqrt %21 : vector<2x128xf32>
    %23 = arith.mulf %19, %19 : vector<2x128xf32>
    %24 = arith.mulf %10, %23 : vector<2x128xf32>
    %25 = arith.mulf %22, %22 : vector<2x128xf32>
    %26 = arith.mulf %13, %25 : vector<2x128xf32>
    %27 = arith.addf %24, %26 : vector<2x128xf32>
    %cst_13 = arith.constant 2.000000e+00 : f32
    %28 = vector.broadcast %cst_13 : f32 to vector<2x128xf32>
    %29 = arith.mulf %28, %16 : vector<2x128xf32>
    %30 = arith.mulf %19, %22 : vector<2x128xf32>
    %31 = arith.mulf %29, %30 : vector<2x128xf32>
    %32 = arith.subf %27, %31 : vector<2x128xf32>
    %cst_14 = arith.constant 0.000000e+00 : f32
    %33 = vector.broadcast %cst_14 : f32 to vector<2x128xf32>
    %34 = arith.maximumf %32, %33 : vector<2x128xf32>
    %35 = arith.mulf %34, %34 : vector<2x128xf32>
    %36 = arith.mulf %35, %34 : vector<2x128xf32>
    %c0_15 = arith.constant 0 : index
    %c0_16 = arith.constant 0 : index
    %c0_17 = arith.constant 0 : index
    %c0_18 = arith.constant 0 : index
    %37 = vector.load %arg5[%c0_15, %c0_16, %c0_17, %c0_18] : memref<1x3x2x128xf32, #tpu.memory_space<vmem>>, vector<1x1x2x128xf32>
    %38 = vector.shape_cast %37 : vector<1x1x2x128xf32> to vector<2x128xf32>
    %39 = arith.addf %38, %34 : vector<2x128xf32>
    %c0_19 = arith.constant 0 : index
    %c0_20 = arith.constant 0 : index
    %c0_21 = arith.constant 0 : index
    %c0_22 = arith.constant 0 : index
    %40 = vector.load %arg5[%c0_19, %c0_20, %c0_21, %c0_22] : memref<1x3x2x128xf32, #tpu.memory_space<vmem>>, vector<1x1x2x128xf32>
    %41 = vector.shape_cast %40 : vector<1x1x2x128xf32> to vector<2x128xf32>
    %42 = vector.shape_cast %39 : vector<2x128xf32> to vector<1x1x2x128xf32>
    tpu.vector_store %arg5[%c0_19, %c0_20, %c0_21, %c0_22], %42 {strides = array<i32>} : memref<1x3x2x128xf32, #tpu.memory_space<vmem>>, vector<1x1x2x128xf32>,
    %c0_23 = arith.constant 0 : index
    %c1 = arith.constant 1 : index
    %c0_24 = arith.constant 0 : index
    %c0_25 = arith.constant 0 : index
    %43 = vector.load %arg5[%c0_23, %c1, %c0_24, %c0_25] : memref<1x3x2x128xf32, #tpu.memory_space<vmem>>, vector<1x1x2x128xf32>
    %44 = vector.shape_cast %43 : vector<1x1x2x128xf32> to vector<2x128xf32>
    %45 = arith.addf %44, %35 : vector<2x128xf32>
    %c0_26 = arith.constant 0 : index
    %c1_27 = arith.constant 1 : index
    %c0_28 = arith.constant 0 : index
    %c0_29 = arith.constant 0 : index
    %46 = vector.load %arg5[%c0_26, %c1_27, %c0_28, %c0_29] : memref<1x3x2x128xf32, #tpu.memory_space<vmem>>, vector<1x1x2x128xf32>
    %47 = vector.shape_cast %46 : vector<1x1x2x128xf32> to vector<2x128xf32>
    %48 = vector.shape_cast %45 : vector<2x128xf32> to vector<1x1x2x128xf32>
    tpu.vector_store %arg5[%c0_26, %c1_27, %c0_28, %c0_29], %48 {strides = array<i32>} : memref<1x3x2x128xf32, #tpu.memory_space<vmem>>, vector<1x1x2x128xf32>,
    %c0_30 = arith.constant 0 : index
    %c2 = arith.constant 2 : index
    %c0_31 = arith.constant 0 : index
    %c0_32 = arith.constant 0 : index
    %49 = vector.load %arg5[%c0_30, %c2, %c0_31, %c0_32] : memref<1x3x2x128xf32, #tpu.memory_space<vmem>>, vector<1x1x2x128xf32>
    %50 = vector.shape_cast %49 : vector<1x1x2x128xf32> to vector<2x128xf32>
    %51 = arith.addf %50, %36 : vector<2x128xf32>
    %c0_33 = arith.constant 0 : index
    %c2_34 = arith.constant 2 : index
    %c0_35 = arith.constant 0 : index
    %c0_36 = arith.constant 0 : index
    %52 = vector.load %arg5[%c0_33, %c2_34, %c0_35, %c0_36] : memref<1x3x2x128xf32, #tpu.memory_space<vmem>>, vector<1x1x2x128xf32>
    %53 = vector.shape_cast %52 : vector<1x1x2x128xf32> to vector<2x128xf32>
    %54 = vector.shape_cast %51 : vector<2x128xf32> to vector<1x1x2x128xf32>
    tpu.vector_store %arg5[%c0_33, %c2_34, %c0_35, %c0_36], %54 {strides = array<i32>} : memref<1x3x2x128xf32, #tpu.memory_space<vmem>>, vector<1x1x2x128xf32>,
    return
  }
  func.func @transform_0(%arg0: i32, %arg1: i32, %arg2: i32) -> (i32, i32, i32, i32) {
    %c1_i32 = arith.constant 1 : i32
    %0 = arith.muli %arg1, %c1_i32 : i32
    %1 = arith.addi %0, %arg2 : i32
    %c0_i32 = arith.constant 0 : i32
    %c0_i32_0 = arith.constant 0 : i32
    %c0_i32_1 = arith.constant 0 : i32
    return %arg0, %c0_i32, %1, %c0_i32_0 : i32, i32, i32, i32
  }
  func.func @transform_1(%arg0: i32, %arg1: i32, %arg2: i32) -> (i32, i32, i32, i32) {
    %c1_i32 = arith.constant 1 : i32
    %0 = arith.muli %arg1, %c1_i32 : i32
    %1 = arith.addi %0, %arg2 : i32
    %c0_i32 = arith.constant 0 : i32
    %c0_i32_0 = arith.constant 0 : i32
    %c0_i32_1 = arith.constant 0 : i32
    return %arg0, %c0_i32, %1, %c0_i32_0 : i32, i32, i32, i32
  }
  func.func @transform_2(%arg0: i32, %arg1: i32, %arg2: i32) -> (i32, i32, i32, i32) {
    %c1_i32 = arith.constant 1 : i32
    %0 = arith.muli %arg0, %c1_i32 : i32
    %1 = arith.addi %0, %arg1 : i32
    %c0_i32 = arith.constant 0 : i32
    %c0_i32_0 = arith.constant 0 : i32
    %c0_i32_1 = arith.constant 0 : i32
    %c0_i32_2 = arith.constant 0 : i32
    return %1, %c0_i32, %c0_i32_0, %c0_i32_1 : i32, i32, i32, i32
  }
}

</mosaic_0001>

<llo_original>
// kernel: tpu_custom_call.1
$region0: #{tpu_custom_call.1}
  #allocation0 [shape = 'u32[]', space=smem, size = 0x4, offset = 0x4, fixed_abs, tag = 'smem constant byte address 0x4 - core index']
  #allocation1 [shape = 'u32[144,128]{1,0:T(1,128)}', space=vmem, size = 0x12000, scoped, tag = 'internal scratch']
  %s0 = inlined_call_operand.hbm [shape: f32[2,4,2,128], index: 0, kind: input, shape index: {}]
  %s1 = inlined_call_operand.hbm [shape: f32[2,4,2,128], index: 1, kind: input, shape index: {}]
  %s2 = inlined_call_operand.hbm [shape: f32[2,3,2,128], index: 2, kind: output, shape index: {}]
  %s3 = sld [smem:[#allocation0]]
  $region53: #{tpu_custom_call.1} parent=0
    _
  %s5 = ssub.s32 1, %s3
  %s6 = scalar_select 0, %s5, %s3
  $region1: #{tpu_custom_call.1} parent=0
    #allocation2 [shape = 'u8[8192]{0}', space=vmem, size = 0x2000, scoped, tag = 'input window, operand 0']
    #allocation3 [shape = 's32[2]{0}', space=sflag, size = 0x8, scoped, tag = 'scoped memory for tpu_custom_call.1']
    #allocation4 [shape = 's32[2]{0}', space=sflag, size = 0x8, scoped, tag = 'scoped memory for tpu_custom_call.1']
    #allocation5 [shape = 'u8[8192]{0}', space=vmem, size = 0x2000, scoped, tag = 'input window, operand 1']
    #allocation6 [shape = 's32[2]{0}', space=sflag, size = 0x8, scoped, tag = 'scoped memory for tpu_custom_call.1']
    #allocation7 [shape = 'u8[6144]{0}', space=vmem, size = 0x1800, scoped, tag = 'output window, operand 0']
    %7 = vsyncpa [#allocation3], 0
    %s8 = scalar_lea.sflag [#allocation3], 1
    %9 = vsyncpa %s8, 0
    %10 = vsyncpa [#allocation6], 0
    %s11 = scalar_lea.sflag [#allocation6], 1
    %12 = vsyncpa %s11, 0
    %13 = vsyncpa [#allocation4], 0
    %s14 = scalar_lea.sflag [#allocation4], 1
    %15 = vsyncpa %s14, 0
    loop: start=0, step=1, limit=4
    $region2: #{tpu_custom_call.1} parent=1 // loop_pre_header
      _
    $region3: #{tpu_custom_call.1} parent=1 // loop_header
      %s17 = sphi 0, %s21
      %p18 = scmp.ge.s32.totalorder %s17, 4
      %s24 = sphi 0, %s43
      %s25 = sphi 0, %s39
      %s26 = sphi 0, %s35
      %s27 = sphi 0, %s24
      %s28 = sphi 0, %s25
      %s29 = sphi 0, %s26
      %s30 = sphi 0, %s27
      %s31 = sphi 0, %s28
      %s32 = sphi 0, %s29
      %s50 = sphi 0, %s52
      %s53 = sphi 0, %s50
      %s54 = sphi 0, %s53
      %s70 = sphi 0, %s54
      %s80 = sphi 0, %s82
      %s83 = sphi 0, %s80
      %s84 = sphi 0, %s83
      %s100 = sphi 0, %s84
      %s108 = sphi 0, %s110
      %s111 = sphi 0, %s108
      %s112 = sphi 0, %s111
      %s128 = sphi 0, %s112
    $region4: #{tpu_custom_call.1} parent=1 // loop_header_branch
      %20 = sbr.rel (%p18) target = $region8
    $region5: #{tpu_custom_call.1} parent=1 // loop_body
      %s22 = ssub.s32 %s17, 1
      %s23 = ssub.s32 %s17, 2
      %s33 = sadd.s32 1, %s26
      %p34 = scmp.ge.s32.totalorder %s33, 1
      %s35 = scalar_select %p34, 0, %s33
      %s36 = sadd.s32 1, %s25
      %s37 = scalar_select %p34, %s36, %s25
      %p38 = scmp.ge.s32.totalorder %s37, 1
      %s39 = scalar_select %p38, 0, %s37
      %s40 = sadd.s32 1, %s24
      %s41 = scalar_select %p38, %s40, %s24
      %p42 = scmp.ge.s32.totalorder %s41, 2
      %s43 = scalar_select %p42, 0, %s41
      %s44 = sadd.s32 %s25, %s26
      %s45 = sadd.s32 %s39, %s35
      %s46 = ssub.s32 %s24, %s43
      %s47 = ssub.s32 %s44, %s45
      %s48 = sor.u32 %s46, %s47
      %p49 = scmp.eq.s32.totalorder %s48, 0
      %s51 = sadd.s32 %s50, 1
      %s52 = scalar_select %p49, %s50, %s51
      %p55 = pneg %p49
      %p56 = scmp.eq.s32.totalorder %s17, 1
      %p57 = por %p55, %p56
      %p58 = scmp.ne.s32.totalorder %s50, %s53
      %p59 = scmp.eq.s32.totalorder %s17, 0
      %p60 = por %p58, %p59
      %p61 = scmp.ne.s32.totalorder %s50, %s53
      %p62 = scmp.eq.s32.totalorder %s22, 1
      %p63 = por %p61, %p62
      %p64 = scmp.ne.s32.totalorder %s53, %s54
      %p65 = scmp.eq.s32.totalorder %s22, 0
      %p66 = por %p64, %p65
      %p67 = scmp.ne.s32.totalorder %s53, %s54
      %p68 = scmp.eq.s32.totalorder %s23, 1
      %p69 = por %p67, %p68
      %p71 = scmp.ne.s32.totalorder %s54, %s70
      %p72 = scmp.eq.s32.totalorder %s23, 0
      %p73 = por %p71, %p72
      %s74 = sadd.s32 %s25, %s26
      %s75 = sadd.s32 %s39, %s35
      %s76 = ssub.s32 %s24, %s43
      %s77 = ssub.s32 %s74, %s75
      %s78 = sor.u32 %s76, %s77
      %p79 = scmp.eq.s32.totalorder %s78, 0
      %s81 = sadd.s32 %s80, 1
      %s82 = scalar_select %p79, %s80, %s81
      %p85 = pneg %p79
      %p86 = scmp.eq.s32.totalorder %s17, 1
      %p87 = por %p85, %p86
      %p88 = scmp.ne.s32.totalorder %s80, %s83
      %p89 = scmp.eq.s32.totalorder %s17, 0
      %p90 = por %p88, %p89
      %p91 = scmp.ne.s32.totalorder %s80, %s83
      %p92 = scmp.eq.s32.totalorder %s22, 1
      %p93 = por %p91, %p92
      %p94 = scmp.ne.s32.totalorder %s83, %s84
      %p95 = scmp.eq.s32.totalorder %s22, 0
      %p96 = por %p94, %p95
      %p97 = scmp.ne.s32.totalorder %s83, %s84
      %p98 = scmp.eq.s32.totalorder %s23, 1
      %p99 = por %p97, %p98
      %p101 = scmp.ne.s32.totalorder %s84, %s100
      %p102 = scmp.eq.s32.totalorder %s23, 0
      %p103 = por %p101, %p102
      %s104 = sadd.s32 %s24, %s25
      %s105 = sadd.s32 %s43, %s39
      %s106 = ssub.s32 %s104, %s105
      %p107 = scmp.eq.s32.totalorder %s106, 0
      %s109 = sadd.s32 %s108, 1
      %s110 = scalar_select %p107, %s108, %s109
      %p113 = pneg %p107
      %p114 = scmp.eq.s32.totalorder %s17, 1
      %p115 = por %p113, %p114
      %p116 = scmp.ne.s32.totalorder %s108, %s111
      %p117 = scmp.eq.s32.totalorder %s17, 0
      %p118 = por %p116, %p117
      %p119 = scmp.ne.s32.totalorder %s108, %s111
      %p120 = scmp.eq.s32.totalorder %s22, 1
      %p121 = por %p119, %p120
      %p122 = scmp.ne.s32.totalorder %s111, %s112
      %p123 = scmp.eq.s32.totalorder %s22, 0
      %p124 = por %p122, %p123
      %p125 = scmp.ne.s32.totalorder %s111, %s112
      %p126 = scmp.eq.s32.totalorder %s23, 1
      %p127 = por %p125, %p126
      %p129 = scmp.ne.s32.totalorder %s112, %s128
      %p130 = scmp.eq.s32.totalorder %s23, 0
      %p131 = por %p129, %p130
      %p132 = scmp.le.s32.totalorder 1, %s17
      %p133 = scmp.lt.s32.totalorder %s17, 3
      %p134 = pnand %p132, %p133
      %p135 = pneg %p134
      // Predicated region
      $region9: #{tpu_custom_call.1} parent=5 // pred_check
        _
      $region10: #{tpu_custom_call.1} parent=5 // pred_check_branch
        %137 = sbr.rel (%p134) target = $region12
      $region11: #{tpu_custom_call.1} parent=5 // pred_region
        %s138 = ssub.s32 %s17, 1
      $region12: #{tpu_custom_call.1} parent=5 // pred_fallthru
        _
      %p139 = scmp.lt.s32.totalorder %s17, 2
      // Predicated region
      $region13: #{tpu_custom_call.1} parent=5 // pred_check
        %p140 = pneg %p139
      $region14: #{tpu_custom_call.1} parent=5 // pred_check_branch
        %142 = sbr.rel (%p140) target = $region16
      $region15: #{tpu_custom_call.1} parent=5 // pred_region
        // Predicated region
        $region17: #{tpu_custom_call.1} parent=15 // pred_check
          %p143 = pneg %p60
        $region18: #{tpu_custom_call.1} parent=15 // pred_check_branch
          %145 = sbr.rel (%p143) target = $region20
        $region19: #{tpu_custom_call.1} parent=15 // pred_region
          %s146 = sand.u32 %s50, 1
          %s147 = scalar_lea.sflag [#allocation3], %s146
          %s148 = sand.u32 %s50, 1
          %s149 = smul.addr %s148, 8
          %s150 = scalar_lea.vmem [#allocation2], %s149
          %s151 = sadd.s32 %s25, %s26
          %s153 = ssub.s32 128, 128
          %154 = vsyncadd %s147, %s153
          %s155 = smul.addr %s24, 4
          %s156 = sadd.s32 %s151, %s155
          %s157 = smul.addr %s156, 32
          %s158 = scalar_lea.hbm %s0, %s157
          %s159 = sshll.u32 %s150, 4
          %s160 = int_to_ptr.vmem [resolvable:$true] %s159
          %165 = dma.hbm_to_vmem [thread:$0]  %s158, 128, %s160, %s147, 32, 32, 2
        $region20: #{tpu_custom_call.1} parent=15 // pred_fallthru
          _
        // Predicated region
        $region21: #{tpu_custom_call.1} parent=15 // pred_check
          %p166 = pneg %p90
        $region22: #{tpu_custom_call.1} parent=15 // pred_check_branch
          %168 = sbr.rel (%p166) target = $region24
        $region23: #{tpu_custom_call.1} parent=15 // pred_region
          %s169 = sand.u32 %s80, 1
          %s170 = scalar_lea.sflag [#allocation6], %s169
          %s171 = sand.u32 %s80, 1
          %s172 = smul.addr %s171, 8
          %s173 = scalar_lea.vmem [#allocation5], %s172
          %s174 = sadd.s32 %s25, %s26
          %s176 = ssub.s32 128, 128
          %177 = vsyncadd %s170, %s176
          %s178 = smul.addr %s24, 4
          %s179 = sadd.s32 %s174, %s178
          %s180 = smul.addr %s179, 32
          %s181 = scalar_lea.hbm %s1, %s180
          %s182 = sshll.u32 %s173, 4
          %s183 = int_to_ptr.vmem [resolvable:$true] %s182
          %188 = dma.hbm_to_vmem [thread:$0]  %s181, 128, %s183, %s170, 32, 32, 2
        $region24: #{tpu_custom_call.1} parent=15 // pred_fallthru
          _
      $region16: #{tpu_custom_call.1} parent=5 // pred_fallthru
        _
      %p189 = scmp.le.s32.totalorder 1, %s17
      %p190 = scmp.lt.s32.totalorder %s17, 3
      %p191 = pnand %p189, %p190
      %p192 = pneg %p191
      // Predicated region
      $region25: #{tpu_custom_call.1} parent=5 // pred_check
        _
      $region26: #{tpu_custom_call.1} parent=5 // pred_check_branch
        %194 = sbr.rel (%p191) target = $region28
      $region27: #{tpu_custom_call.1} parent=5 // pred_region
        %s195 = ssub.s32 %s17, 1
        %s196 = sand.u32 %s53, 1
        %s197 = scalar_lea.sflag [#allocation3], %s196
        %s198 = sand.u32 %s53, 1
        %s199 = smul.addr %s198, 8
        %s200 = scalar_lea.vmem [#allocation2], %s199
        // Predicated region
        $region29: #{tpu_custom_call.1} parent=27 // pred_check
          %p201 = pneg %p66
        $region30: #{tpu_custom_call.1} parent=27 // pred_check_branch
          %203 = sbr.rel (%p201) target = $region32
        $region31: #{tpu_custom_call.1} parent=27 // pred_region
          %204 = dma.done %s197, 128
        $region32: #{tpu_custom_call.1} parent=27 // pred_fallthru
          _
        %s205 = sand.u32 %s83, 1
        %s206 = scalar_lea.sflag [#allocation6], %s205
        %s207 = sand.u32 %s83, 1
        %s208 = smul.addr %s207, 8
        %s209 = scalar_lea.vmem [#allocation5], %s208
        // Predicated region
        $region33: #{tpu_custom_call.1} parent=27 // pred_check
          %p210 = pneg %p96
        $region34: #{tpu_custom_call.1} parent=27 // pred_check_branch
          %212 = sbr.rel (%p210) target = $region36
        $region35: #{tpu_custom_call.1} parent=27 // pred_region
          %213 = dma.done %s206, 128
        $region36: #{tpu_custom_call.1} parent=27 // pred_fallthru
          _
        %s214 = sand.u32 %s53, 1
        %s215 = scalar_lea.sflag [#allocation3], %s214
        %s216 = sand.u32 %s53, 1
        %s217 = smul.addr %s216, 8
        %s218 = scalar_lea.vmem [#allocation2], %s217
        %p219 = pneg %p66
        %p220 = pneg %p63
        %s221 = sand.u32 %s83, 1
        %s222 = scalar_lea.sflag [#allocation6], %s221
        %s223 = sand.u32 %s83, 1
        %s224 = smul.addr %s223, 8
        %s225 = scalar_lea.vmem [#allocation5], %s224
        %p226 = pneg %p96
        %p227 = pneg %p93
        %p228 = pneg %p124
        %p229 = pneg %p121
        %s230 = sand.u32 %s111, 1
        %s231 = scalar_lea.sflag [#allocation4], %s230
        %s232 = sand.u32 %s111, 1
        %s233 = smul.addr %s232, 6
        %s234 = scalar_lea.vmem [#allocation7], %s233
        %s235 = sadd.s32 %s28, %s29
        %s236 = sadd.s32 %s28, %s29
        %s237 = sadd.s32 %s27, %s28
        %p238 = scmp.eq.s32.totalorder %s29, 0
        // Predicated region
        $region37: #{tpu_custom_call.1} parent=27 // pred_check
          %p239 = pneg %p238
        $region38: #{tpu_custom_call.1} parent=27 // pred_check_branch
          %241 = sbr.rel (%p239) target = $region40
        $region39: #{tpu_custom_call.1} parent=27 // pred_region
          %242 = vst [vmem:[%s234] sm:$0x3] 0.0
          %243 = vst [vmem:[%s234 + $0x2] sm:$0x3] 0.0
          %244 = vst [vmem:[%s234 + $0x4] sm:$0x3] 0.0
        $region40: #{tpu_custom_call.1} parent=27 // pred_fallthru
          _
        %v245 = vld [vmem:[%s200] sm:$0x3]
        %v246 = vld [vmem:[%s200 + $0x2] sm:$0x3]
        %v247 = vld [vmem:[%s200 + $0x4] sm:$0x3]
        %v248 = vld [vmem:[%s200 + $0x6] sm:$0x3]
        %v249 = vld [vmem:[%s209] sm:$0x3]
        %v250 = vld [vmem:[%s209 + $0x2] sm:$0x3]
        %v251 = vld [vmem:[%s209 + $0x4] sm:$0x3]
        %v252 = vld [vmem:[%s209 + $0x6] sm:$0x3]
        %v253 = vmul.f32 %v245, %v245
        %v254 = vmul.f32 %v246, %v246
        %v255 = vmul.f32 %v247, %v247
        %v256 = vmul.f32 %v248, %v248
        %vm257 = vcmask 1041408
        %v258 = vsel %vm257, %v253, 0.0
        %v259 = vsel %vm257, %v254, 0.0
        %v260 = vadd.f32 %v258, %v259
        %v261 = vsel %vm257, %v255, 0.0
        %v262 = vadd.f32 %v260, %v261
        %v263 = vsel %vm257, %v256, 0.0
        %v264 = vadd.f32 %v262, %v263
        %v265 = vadd.f32 %v264, 0.0
        %v266 = vmul.f32 %v249, %v249
        %v267 = vmul.f32 %v250, %v250
        %v268 = vmul.f32 %v251, %v251
        %v269 = vmul.f32 %v252, %v252
        %v270 = vsel %vm257, %v266, 0.0
        %v271 = vsel %vm257, %v267, 0.0
        %v272 = vadd.f32 %v270, %v271
        %v273 = vsel %vm257, %v268, 0.0
        %v274 = vadd.f32 %v272, %v273
        %v275 = vsel %vm257, %v269, 0.0
        %v276 = vadd.f32 %v274, %v275
        %v277 = vadd.f32 %v276, 0.0
        %v278 = vmul.f32 %v245, %v249
        %v279 = vmul.f32 %v246, %v250
        %v280 = vmul.f32 %v247, %v251
        %v281 = vmul.f32 %v248, %v252
        %v282 = vsel %vm257, %v278, 0.0
        %v283 = vsel %vm257, %v279, 0.0
        %v284 = vadd.f32 %v282, %v283
        %v285 = vsel %vm257, %v280, 0.0
        %v286 = vadd.f32 %v284, %v285
        %v287 = vsel %vm257, %v281, 0.0
        %v288 = vadd.f32 %v286, %v287
        %v289 = vadd.f32 %v288, 0.0
        %v290 = vmax.f32 %v265, 1e-24
        %v291 = vrsqrt.pop %v290
        %v292 = vmax.f32 %v277, 1e-24
        %v293 = vrsqrt.pop %v292
        %v294 = vmul.f32 %v291, %v291
        %v295 = vmul.f32 %v265, %v294
        %v296 = vmul.f32 %v293, %v293
        %v297 = vmul.f32 %v277, %v296
        %v298 = vadd.f32 %v295, %v297
        %v299 = vmul.f32 %v289, 2.0
        %v300 = vmul.f32 %v291, %v293
        %v301 = vmul.f32 %v299, %v300
        %v302 = vsub.f32 %v298, %v301
        %v303 = vmax.f32 %v302, 0.0
        %v304 = vmul.f32 %v303, %v303
        %v305 = vmul.f32 %v304, %v303
        %v306 = vld [vmem:[%s234] sm:$0x3]
        %v307 = vadd.f32 %v306, %v303
        %308 = vst [vmem:[%s234] sm:$0x3] %v307
        %s309 = scalar_lea.vmem %s234, 2 [#allocation7]
        %v310 = vld [vmem:[%s309] sm:$0x3]
        %v311 = vadd.f32 %v310, %v304
        %312 = vst [vmem:[%s309] sm:$0x3] %v311
        %s313 = scalar_lea.vmem %s234, 4 [#allocation7]
        %v314 = vld [vmem:[%s313] sm:$0x3]
        %v315 = vadd.f32 %v314, %v305
        %316 = vst [vmem:[%s313] sm:$0x3] %v315
        %s317 = sand.u32 %s111, 1
        %s318 = scalar_lea.sflag [#allocation4], %s317
        %s319 = sand.u32 %s111, 1
        %s320 = smul.addr %s319, 6
        %s321 = scalar_lea.vmem [#allocation7], %s320
        // Predicated region
        $region41: #{tpu_custom_call.1} parent=27 // pred_check
          %p322 = pneg %p121
        $region42: #{tpu_custom_call.1} parent=27 // pred_check_branch
          %324 = sbr.rel (%p322) target = $region44
        $region43: #{tpu_custom_call.1} parent=27 // pred_region
          %s325 = sadd.s32 %s27, %s28
          %s327 = ssub.s32 96, 96
          %328 = vsyncadd %s318, %s327
          %s329 = smul.addr %s325, 3
          %s330 = smul.addr %s329, 32
          %s331 = scalar_lea.hbm %s2, %s330
          %s332 = sshll.u32 %s321, 4
          %s333 = int_to_ptr.vmem [resolvable:$true] %s332
          %338 = dma.vmem_to_hbm [thread:$0]  %s333, 96, %s331, %s318, 32, 32, 2
        $region44: #{tpu_custom_call.1} parent=27 // pred_fallthru
          _
      $region28: #{tpu_custom_call.1} parent=5 // pred_fallthru
        _
      %p339 = scmp.le.s32.totalorder 2, %s17
      // Predicated region
      $region45: #{tpu_custom_call.1} parent=5 // pred_check
        %p340 = pneg %p339
      $region46: #{tpu_custom_call.1} parent=5 // pred_check_branch
        %342 = sbr.rel (%p340) target = $region48
      $region47: #{tpu_custom_call.1} parent=5 // pred_region
        %s343 = ssub.s32 %s17, 2
        // Predicated region
        $region49: #{tpu_custom_call.1} parent=47 // pred_check
          %p344 = pneg %p127
        $region50: #{tpu_custom_call.1} parent=47 // pred_check_branch
          %346 = sbr.rel (%p344) target = $region52
        $region51: #{tpu_custom_call.1} parent=47 // pred_region
          %s347 = sand.u32 %s112, 1
          %s348 = scalar_lea.sflag [#allocation4], %s347
          %s349 = sand.u32 %s112, 1
          %s350 = smul.addr %s349, 6
          %s351 = scalar_lea.vmem [#allocation7], %s350
          %352 = dma.done %s348, 96
        $region52: #{tpu_custom_call.1} parent=47 // pred_fallthru
          _
      $region48: #{tpu_custom_call.1} parent=5 // pred_fallthru
        _
    $region6: #{tpu_custom_call.1} parent=1 // loop_footer
      %s21 = sadd.s32 1, %s17
    $region7: #{tpu_custom_call.1} parent=1 // loop_footer_branch
      %16 = sbr.rel target = $region3
    $region8: #{tpu_custom_call.1} parent=1 // loop_exit
      _
    %353 = vsyncpa [#allocation3], 1
    %s354 = scalar_lea.sflag [#allocation3], 1
    %355 = vsyncpa %s354, 1
    %356 = vsyncpa [#allocation6], 1
    %s357 = scalar_lea.sflag [#allocation6], 1
    %358 = vsyncpa %s357, 1
    %359 = vsyncpa [#allocation4], 1
    %s360 = scalar_lea.sflag [#allocation4], 1
    %361 = vsyncpa %s360, 1

</llo_original>
